<compile_context>
chip_gen: v7x
topology: tpu7x:2x2x1
jax: 0.10.0
libtpu: 0.0.40
codegen_flags: <defaults>
</compile_context>

<pallas_src>
import functools

import jax
import jax.numpy as jnp
from jax.experimental import pallas as pl
from jax.experimental.pallas import tpu as pltpu

IN_FEATURES = 21
HIDDEN = 256
OUT_FEATURES = 18
IN_PAD = 128     # lane-dense padded input width
OUT_PAD = 128    # lane-dense padded output width
NEG_SLOPE = 0.01
PRIOR_SIGMA = 0.01


def _leaky_relu(x):
    return jnp.where(x > 0, x, NEG_SLOPE * x)


def _mlp_kernel(x_ref, w1_ref, b1_ref, w2_ref, b2_ref, w3_ref, b3_ref, o_ref):
    # x / W are bf16; every dot accumulates in f32; bias + LeakyReLU in f32.
    h = jnp.dot(x_ref[...], w1_ref[...], preferred_element_type=jnp.float32)
    h = _leaky_relu(h + b1_ref[...])

    h = jnp.dot(h.astype(jnp.bfloat16), w2_ref[...],
                preferred_element_type=jnp.float32)
    h = _leaky_relu(h + b2_ref[...])

    out = jnp.dot(h.astype(jnp.bfloat16), w3_ref[...],
                  preferred_element_type=jnp.float32)
    o_ref[...] = (out + b3_ref[...]).astype(o_ref.dtype)


def _pad2(a, rows, cols):
    return jnp.pad(a, ((0, rows - a.shape[0]), (0, cols - a.shape[1])))


def _choose_tm(batch, tm_max=1024):
    """Pick a batch tile: big enough to fill the MXU, >=2 grid steps when possible."""
    tm = min(tm_max, max(8, pl.next_power_of_2(batch)))
    if batch <= tm and tm >= 16:
        tm //= 2  # keep at least 2 parallel grid steps (v7x has 2 TensorCores)
    return tm


@functools.partial(jax.jit, static_argnames=("tm_max",))
def reg_nagato_forward(x, w1, b1, w2, b2, w3, b3, *, tm_max=1024):
    """x: (B, 21) float32; weights in (in, out) layout, biases (1, out). -> (B, 18) f32."""
    B = x.shape[0]
    tm = _choose_tm(B, tm_max)
    n_steps = pl.cdiv(B, tm)
    B_pad = n_steps * tm

    # Lane-dense, bf16 operands.
    x_p = _pad2(x, B_pad, IN_PAD).astype(jnp.bfloat16)
    w1_p = _pad2(w1, IN_PAD, HIDDEN).astype(jnp.bfloat16)
    w2_p = w2.astype(jnp.bfloat16)
    w3_p = _pad2(w3, HIDDEN, OUT_PAD).astype(jnp.bfloat16)
    b1_p = b1.astype(jnp.float32)
    b2_p = b2.astype(jnp.float32)
    b3_p = _pad2(b3, 1, OUT_PAD).astype(jnp.float32)

    weight_bytes = 2 * (IN_PAD * HIDDEN + HIDDEN * HIDDEN + HIDDEN * OUT_PAD)
    cost = pl.CostEstimate(
        flops=2 * B_pad * (IN_PAD * HIDDEN + HIDDEN * HIDDEN + HIDDEN * OUT_PAD),
        transcendentals=0,
        bytes_accessed=B_pad * IN_PAD * 2 + B_pad * OUT_PAD * 4
        + weight_bytes + 4 * (2 * HIDDEN + OUT_PAD),
    )

    const = lambda shape: pl.BlockSpec(shape, lambda i: (0, 0))  # resident weights

    out_pad = pl.pallas_call(
        _mlp_kernel,
        out_shape=jax.ShapeDtypeStruct((B_pad, OUT_PAD), jnp.float32),
        grid_spec=pltpu.PrefetchScalarGridSpec(
            num_scalar_prefetch=0,
            grid=(n_steps,),
            in_specs=[
                pl.BlockSpec((tm, IN_PAD), lambda i: (i, 0)),   # x tile
                const((IN_PAD, HIDDEN)),                        # W1
                const((1, HIDDEN)),                             # b1
                const((HIDDEN, HIDDEN)),                        # W2
                const((1, HIDDEN)),                             # b2
                const((HIDDEN, OUT_PAD)),                       # W3 (padded)
                const((1, OUT_PAD)),                            # b3 (padded)
            ],
            out_specs=pl.BlockSpec((tm, OUT_PAD), lambda i: (i, 0)),
        ),
        compiler_params=pltpu.CompilerParams(
            dimension_semantics=("parallel",),
        ),
        cost_estimate=cost,
    )(x_p, w1_p, b1_p, w2_p, b2_p, w3_p, b3_p)

    return out_pad[:B, :OUT_FEATURES]


def _init_bayes_linear(key, in_features, out_features):
    """Deterministic synthetic init mimicking torchbnn.BayesLinear + one forward sample.

    mu ~ U(-1/sqrt(in), 1/sqrt(in)); log_sigma = log(prior_sigma);
    sampled weight = mu + exp(log_sigma) * eps, eps ~ N(0,1) (fixed by key).
    Returns (W, b) with W already transposed to (in_features, out_features).
    """
    k_wmu, k_bmu, k_weps, k_beps = jax.random.split(key, 4)
    bound = 1.0 / jnp.sqrt(jnp.float32(in_features))

    w_mu = jax.random.uniform(k_wmu, (out_features, in_features),
                              minval=-bound, maxval=bound, dtype=jnp.float32)
    b_mu = jax.random.uniform(k_bmu, (out_features,),
                              minval=-bound, maxval=bound, dtype=jnp.float32)
    log_sigma = jnp.log(jnp.float32(PRIOR_SIGMA))

    w_eps = jax.random.normal(k_weps, (out_features, in_features), dtype=jnp.float32)
    b_eps = jax.random.normal(k_beps, (out_features,), dtype=jnp.float32)

    w = w_mu + jnp.exp(log_sigma) * w_eps   # (out, in) -- PyTorch layout
    b = b_mu + jnp.exp(log_sigma) * b_eps   # (out,)

    return w.T, b.reshape(1, out_features)  # kernel layout: (in, out), (1, out)


def reference_forward(x, w1, b1, w2, b2, w3, b3):
    """Pure-JAX reference using the same bf16-input / f32-accumulate dtype path."""
    xb = x.astype(jnp.bfloat16)
    w1b, w2b, w3b = (w.astype(jnp.bfloat16) for w in (w1, w2, w3))
    h = _leaky_relu(jnp.dot(xb, w1b, preferred_element_type=jnp.float32) + b1)
    h = _leaky_relu(jnp.dot(h.astype(jnp.bfloat16), w2b,
                            preferred_element_type=jnp.float32) + b2)
    return jnp.dot(h.astype(jnp.bfloat16), w3b,
                   preferred_element_type=jnp.float32) + b3


if __name__ == "__main__":
    key = jax.random.PRNGKey(0)
    k_x, k1, k2, k3 = jax.random.split(key, 4)

    batch = 16  # small demo batch (not a multiple constraint anymore; any B works)
    x = jax.random.normal(k_x, (batch, IN_FEATURES), dtype=jnp.float32)

    w1, b1 = _init_bayes_linear(k1, IN_FEATURES, HIDDEN)
    w2, b2 = _init_bayes_linear(k2, HIDDEN, HIDDEN)
    w3, b3 = _init_bayes_linear(k3, HIDDEN, OUT_FEATURES)

    out = reg_nagato_forward(x, w1, b1, w2, b2, w3, b3)
    out = jax.block_until_ready(out)

    ref = reference_forward(x, w1, b1, w2, b2, w3, b3)
    assert out.shape == (batch, OUT_FEATURES)
    assert jnp.allclose(out, ref, atol=1e-2, rtol=1e-2), "mismatch vs pure-JAX reference"

    print("KERNEL_OK")
</pallas_src>

<mosaic_0001>
module attributes {stable_mosaic.version = 11 : i64} {
  func.func @_mlp_kernel(%arg0: i32, %arg1: memref<8x128xbf16, #tpu.memory_space<vmem>>, %arg2: memref<128x256xbf16, #tpu.memory_space<vmem>>, %arg3: memref<1x256xf32, #tpu.memory_space<vmem>>, %arg4: memref<256x256xbf16, #tpu.memory_space<vmem>>, %arg5: memref<1x256xf32, #tpu.memory_space<vmem>>, %arg6: memref<256x128xbf16, #tpu.memory_space<vmem>>, %arg7: memref<1x128xf32, #tpu.memory_space<vmem>>, %arg8: memref<8x128xf32, #tpu.memory_space<vmem>>) attributes {dimension_semantics = [#tpu.dimension_semantics<parallel>], iteration_bounds = array<i64: 2>, scalar_prefetch = 0 : i64, scratch_operands = 0 : i64, tpu.core_type = #tpu.core_type<tc>, window_params = [{transform_indices = @transform_0, window_bounds = array<i64: 8, 128>}, {pipeline_mode = #tpu.pipeline_mode<synchronous>, transform_indices = @transform_1, window_bounds = array<i64: 128, 256>}, {pipeline_mode = #tpu.pipeline_mode<synchronous>, transform_indices = @transform_2, window_bounds = array<i64: 1, 256>}, {pipeline_mode = #tpu.pipeline_mode<synchronous>, transform_indices = @transform_3, window_bounds = array<i64: 256, 256>}, {pipeline_mode = #tpu.pipeline_mode<synchronous>, transform_indices = @transform_4, window_bounds = array<i64: 1, 256>}, {pipeline_mode = #tpu.pipeline_mode<synchronous>, transform_indices = @transform_5, window_bounds = array<i64: 256, 128>}, {pipeline_mode = #tpu.pipeline_mode<synchronous>, transform_indices = @transform_6, window_bounds = array<i64: 1, 128>}, {transform_indices = @transform_7, window_bounds = array<i64: 8, 128>}]} {
    %c0 = arith.constant 0 : index
    %c0_0 = arith.constant 0 : index
    %0 = vector.load %arg1[%c0, %c0_0] : memref<8x128xbf16, #tpu.memory_space<vmem>>, vector<8x128xbf16>
    %c0_1 = arith.constant 0 : index
    %c0_2 = arith.constant 0 : index
    %1 = vector.load %arg2[%c0_1, %c0_2] : memref<128x256xbf16, #tpu.memory_space<vmem>>, vector<128x256xbf16>
    %cst = arith.constant dense<0.000000e+00> : vector<8x256xf32>
    %2 = tpu.matmul %0, %1, %cst {dimension_numbers = #tpu.dot_dimension_numbers<[1], [0], [0], [1], [0, 0, 1, 1], [], []>} : vector<8x128xbf16>, vector<128x256xbf16>, vector<8x256xf32> -> vector<8x256xf32>
    %c0_3 = arith.constant 0 : index
    %c0_4 = arith.constant 0 : index
    %3 = vector.load %arg3[%c0_3, %c0_4] : memref<1x256xf32, #tpu.memory_space<vmem>>, vector<1x256xf32>
    %4 = vector.broadcast %3 : vector<1x256xf32> to vector<8x256xf32>
    %5 = arith.addf %2, %4 : vector<8x256xf32>
    %cst_5 = arith.constant 0.000000e+00 : f32
    %6 = vector.broadcast %cst_5 : f32 to vector<8x256xf32>
    %7 = arith.cmpf ogt, %5, %6 : vector<8x256xf32>
    %cst_6 = arith.constant 0.00999999977 : f32
    %8 = vector.broadcast %cst_6 : f32 to vector<8x256xf32>
    %9 = arith.mulf %8, %5 : vector<8x256xf32>
    %10 = arith.select %7, %5, %9 : vector<8x256xi1>, vector<8x256xf32>
    %11 = arith.truncf %10 : vector<8x256xf32> to vector<8x256xbf16>
    %c0_7 = arith.constant 0 : index
    %c0_8 = arith.constant 0 : index
    %12 = vector.load %arg4[%c0_7, %c0_8] : memref<256x256xbf16, #tpu.memory_space<vmem>>, vector<256x256xbf16>
    %cst_9 = arith.constant dense<0.000000e+00> : vector<8x256xf32>
    %13 = tpu.matmul %11, %12, %cst_9 {dimension_numbers = #tpu.dot_dimension_numbers<[1], [0], [0], [1], [0, 0, 1, 1], [], []>} : vector<8x256xbf16>, vector<256x256xbf16>, vector<8x256xf32> -> vector<8x256xf32>
    %c0_10 = arith.constant 0 : index
    %c0_11 = arith.constant 0 : index
    %14 = vector.load %arg5[%c0_10, %c0_11] : memref<1x256xf32, #tpu.memory_space<vmem>>, vector<1x256xf32>
    %15 = vector.broadcast %14 : vector<1x256xf32> to vector<8x256xf32>
    %16 = arith.addf %13, %15 : vector<8x256xf32>
    %cst_12 = arith.constant 0.000000e+00 : f32
    %17 = vector.broadcast %cst_12 : f32 to vector<8x256xf32>
    %18 = arith.cmpf ogt, %16, %17 : vector<8x256xf32>
    %cst_13 = arith.constant 0.00999999977 : f32
    %19 = vector.broadcast %cst_13 : f32 to vector<8x256xf32>
    %20 = arith.mulf %19, %16 : vector<8x256xf32>
    %21 = arith.select %18, %16, %20 : vector<8x256xi1>, vector<8x256xf32>
    %22 = arith.truncf %21 : vector<8x256xf32> to vector<8x256xbf16>
    %c0_14 = arith.constant 0 : index
    %c0_15 = arith.constant 0 : index
    %23 = vector.load %arg6[%c0_14, %c0_15] : memref<256x128xbf16, #tpu.memory_space<vmem>>, vector<256x128xbf16>
    %cst_16 = arith.constant dense<0.000000e+00> : vector<8x128xf32>
    %24 = tpu.matmul %22, %23, %cst_16 {dimension_numbers = #tpu.dot_dimension_numbers<[1], [0], [0], [1], [0, 0, 1, 1], [], []>} : vector<8x256xbf16>, vector<256x128xbf16>, vector<8x128xf32> -> vector<8x128xf32>
    %c0_17 = arith.constant 0 : index
    %c0_18 = arith.constant 0 : index
    %25 = vector.load %arg7[%c0_17, %c0_18] : memref<1x128xf32, #tpu.memory_space<vmem>>, vector<1x128xf32>
    %26 = vector.broadcast %25 : vector<1x128xf32> to vector<8x128xf32>
    %27 = arith.addf %24, %26 : vector<8x128xf32>
    %c0_19 = arith.constant 0 : index
    %c0_20 = arith.constant 0 : index
    %28 = vector.load %arg8[%c0_19, %c0_20] : memref<8x128xf32, #tpu.memory_space<vmem>>, vector<8x128xf32>
    tpu.vector_store %arg8[%c0_19, %c0_20], %27 {strides = array<i32>} : memref<8x128xf32, #tpu.memory_space<vmem>>, vector<8x128xf32>,
    return
  }
  func.func @transform_0(%arg0: i32) -> (i32, i32) {
    %c0_i32 = arith.constant 0 : i32
    %c0_i32_0 = arith.constant 0 : i32
    return %arg0, %c0_i32 : i32, i32
  }
  func.func @transform_1(%arg0: i32) -> (i32, i32) {
    %c0_i32 = arith.constant 0 : i32
    %c0_i32_0 = arith.constant 0 : i32
    %c0_i32_1 = arith.constant 0 : i32
    return %c0_i32, %c0_i32_0 : i32, i32
  }
  func.func @transform_2(%arg0: i32) -> (i32, i32) {
    %c0_i32 = arith.constant 0 : i32
    %c0_i32_0 = arith.constant 0 : i32
    %c0_i32_1 = arith.constant 0 : i32
    return %c0_i32, %c0_i32_0 : i32, i32
  }
  func.func @transform_3(%arg0: i32) -> (i32, i32) {
    %c0_i32 = arith.constant 0 : i32
    %c0_i32_0 = arith.constant 0 : i32
    %c0_i32_1 = arith.constant 0 : i32
    return %c0_i32, %c0_i32_0 : i32, i32
  }
  func.func @transform_4(%arg0: i32) -> (i32, i32) {
    %c0_i32 = arith.constant 0 : i32
    %c0_i32_0 = arith.constant 0 : i32
    %c0_i32_1 = arith.constant 0 : i32
    return %c0_i32, %c0_i32_0 : i32, i32
  }
  func.func @transform_5(%arg0: i32) -> (i32, i32) {
    %c0_i32 = arith.constant 0 : i32
    %c0_i32_0 = arith.constant 0 : i32
    %c0_i32_1 = arith.constant 0 : i32
    return %c0_i32, %c0_i32_0 : i32, i32
  }
  func.func @transform_6(%arg0: i32) -> (i32, i32) {
    %c0_i32 = arith.constant 0 : i32
    %c0_i32_0 = arith.constant 0 : i32
    %c0_i32_1 = arith.constant 0 : i32
    return %c0_i32, %c0_i32_0 : i32, i32
  }
  func.func @transform_7(%arg0: i32) -> (i32, i32) {
    %c0_i32 = arith.constant 0 : i32
    %c0_i32_0 = arith.constant 0 : i32
    return %arg0, %c0_i32 : i32, i32
  }
}

</mosaic_0001>

<llo_original>
// kernel: reg_nagato_forward.1
$region0: #{reg_nagato_forward.1}
  #allocation0 [shape = 'u32[]', space=smem, size = 0x4, offset = 0x4, fixed_abs, tag = 'smem constant byte address 0x4 - core index']
  #allocation1 [shape = 'u32[144,128]{1,0:T(1,128)}', space=vmem, size = 0x12000, scoped, tag = 'internal scratch']
  %s0 = inlined_call_operand.vmem [shape: bf16[16,128], index: 0, kind: input, shape index: {}]
  %s1 = inlined_call_operand.vmem [shape: bf16[128,256], index: 1, kind: input, shape index: {}]
  %s2 = inlined_call_operand.vmem [shape: f32[1,256], index: 2, kind: input, shape index: {}]
  %s3 = inlined_call_operand.vmem [shape: bf16[256,256], index: 3, kind: input, shape index: {}]
  %s4 = inlined_call_operand.vmem [shape: f32[1,256], index: 4, kind: input, shape index: {}]
  %s5 = inlined_call_operand.vmem [shape: bf16[256,128], index: 5, kind: input, shape index: {}]
  %s6 = inlined_call_operand.vmem [shape: f32[1,128], index: 6, kind: input, shape index: {}]
  %s7 = inlined_call_operand.hbm [shape: f32[16,128], index: 7, kind: output, shape index: {}]
  %s8 = sld [smem:[#allocation0]]
  $region61: #{reg_nagato_forward.1} parent=0
    _
  %s10 = ssub.s32 1, %s8
  %s11 = scalar_select 0, %s10, %s8
  $region1: #{reg_nagato_forward.1} parent=0
    #allocation2 [shape = 'u8[8192]{0}', space=vmem, size = 0x2000, scoped, tag = 'output window, operand 0']
    #allocation3 [shape = 's32[2]{0}', space=sflag, size = 0x8, scoped, tag = 'scoped memory for reg_nagato_forward.1']
    %12 = vsyncpa [#allocation3], 0
    %s13 = scalar_lea.sflag [#allocation3], 1
    %14 = vsyncpa %s13, 0
    loop: start=0, step=1, limit=4
    $region2: #{reg_nagato_forward.1} parent=1 // loop_pre_header
      _
    $region3: #{reg_nagato_forward.1} parent=1 // loop_header
      %s16 = sphi 0, %s20
      %p17 = scmp.ge.s32.totalorder %s16, 4
      %s26 = sphi 0, %s28
      %s29 = sphi 0, %s26
      %s30 = sphi 0, %s29
      %s46 = sphi 0, %s30
      %s50 = sphi 0, %s50
      %s52 = sphi 0, %s50
      %s53 = sphi 0, %s52
      %s67 = sphi 0, %s53
      %s71 = sphi 0, %s71
      %s73 = sphi 0, %s71
      %s74 = sphi 0, %s73
      %s88 = sphi 0, %s74
      %s92 = sphi 0, %s92
      %s94 = sphi 0, %s92
      %s95 = sphi 0, %s94
      %s109 = sphi 0, %s95
      %s113 = sphi 0, %s113
      %s115 = sphi 0, %s113
      %s116 = sphi 0, %s115
      %s130 = sphi 0, %s116
      %s134 = sphi 0, %s134
      %s136 = sphi 0, %s134
      %s137 = sphi 0, %s136
      %s151 = sphi 0, %s137
      %s155 = sphi 0, %s155
      %s157 = sphi 0, %s155
      %s158 = sphi 0, %s157
      %s172 = sphi 0, %s158
      %s178 = sphi 0, %s180
      %s181 = sphi 0, %s178
      %s182 = sphi 0, %s181
      %s198 = sphi 0, %s182
    $region4: #{reg_nagato_forward.1} parent=1 // loop_header_branch
      %19 = sbr.rel (%p17) target = $region8
    $region5: #{reg_nagato_forward.1} parent=1 // loop_body
      %s21 = ssub.s32 %s16, 1
      %s22 = ssub.s32 %s16, 2
      %s23 = sadd.s32 %s16, 1
      %s24 = ssub.s32 %s16, %s23
      %p25 = scmp.eq.s32.totalorder %s24, 0
      %s27 = sadd.s32 %s26, 1
      %s28 = scalar_select %p25, %s26, %s27
      %p31 = pneg %p25
      %p32 = scmp.eq.s32.totalorder %s16, 1
      %p33 = por %p31, %p32
      %p34 = scmp.ne.s32.totalorder %s26, %s29
      %p35 = scmp.eq.s32.totalorder %s16, 0
      %p36 = por %p34, %p35
      %p37 = scmp.ne.s32.totalorder %s26, %s29
      %p38 = scmp.eq.s32.totalorder %s21, 1
      %p39 = por %p37, %p38
      %p40 = scmp.ne.s32.totalorder %s29, %s30
      %p41 = scmp.eq.s32.totalorder %s21, 0
      %p42 = por %p40, %p41
      %p43 = scmp.ne.s32.totalorder %s29, %s30
      %p44 = scmp.eq.s32.totalorder %s22, 1
      %p45 = por %p43, %p44
      %p47 = scmp.ne.s32.totalorder %s30, %s46
      %p48 = scmp.eq.s32.totalorder %s22, 0
      %p49 = por %p47, %p48
      %s51 = sadd.s32 %s50, 1
      %p54 = scmp.eq.s32.totalorder %s16, 1
      %p55 = scmp.ne.s32.totalorder %s50, %s52
      %p56 = scmp.eq.s32.totalorder %s16, 0
      %p57 = por %p55, %p56
      %p58 = scmp.ne.s32.totalorder %s50, %s52
      %p59 = scmp.eq.s32.totalorder %s21, 1
      %p60 = por %p58, %p59
      %p61 = scmp.ne.s32.totalorder %s52, %s53
      %p62 = scmp.eq.s32.totalorder %s21, 0
      %p63 = por %p61, %p62
      %p64 = scmp.ne.s32.totalorder %s52, %s53
      %p65 = scmp.eq.s32.totalorder %s22, 1
      %p66 = por %p64, %p65
      %p68 = scmp.ne.s32.totalorder %s53, %s67
      %p69 = scmp.eq.s32.totalorder %s22, 0
      %p70 = por %p68, %p69
      %s72 = sadd.s32 %s71, 1
      %p75 = scmp.eq.s32.totalorder %s16, 1
      %p76 = scmp.ne.s32.totalorder %s71, %s73
      %p77 = scmp.eq.s32.totalorder %s16, 0
      %p78 = por %p76, %p77
      %p79 = scmp.ne.s32.totalorder %s71, %s73
      %p80 = scmp.eq.s32.totalorder %s21, 1
      %p81 = por %p79, %p80
      %p82 = scmp.ne.s32.totalorder %s73, %s74
      %p83 = scmp.eq.s32.totalorder %s21, 0
      %p84 = por %p82, %p83
      %p85 = scmp.ne.s32.totalorder %s73, %s74
      %p86 = scmp.eq.s32.totalorder %s22, 1
      %p87 = por %p85, %p86
      %p89 = scmp.ne.s32.totalorder %s74, %s88
      %p90 = scmp.eq.s32.totalorder %s22, 0
      %p91 = por %p89, %p90
      %s93 = sadd.s32 %s92, 1
      %p96 = scmp.eq.s32.totalorder %s16, 1
      %p97 = scmp.ne.s32.totalorder %s92, %s94
      %p98 = scmp.eq.s32.totalorder %s16, 0
      %p99 = por %p97, %p98
      %p100 = scmp.ne.s32.totalorder %s92, %s94
      %p101 = scmp.eq.s32.totalorder %s21, 1
      %p102 = por %p100, %p101
      %p103 = scmp.ne.s32.totalorder %s94, %s95
      %p104 = scmp.eq.s32.totalorder %s21, 0
      %p105 = por %p103, %p104
      %p106 = scmp.ne.s32.totalorder %s94, %s95
      %p107 = scmp.eq.s32.totalorder %s22, 1
      %p108 = por %p106, %p107
      %p110 = scmp.ne.s32.totalorder %s95, %s109
      %p111 = scmp.eq.s32.totalorder %s22, 0
      %p112 = por %p110, %p111
      %s114 = sadd.s32 %s113, 1
      %p117 = scmp.eq.s32.totalorder %s16, 1
      %p118 = scmp.ne.s32.totalorder %s113, %s115
      %p119 = scmp.eq.s32.totalorder %s16, 0
      %p120 = por %p118, %p119
      %p121 = scmp.ne.s32.totalorder %s113, %s115
      %p122 = scmp.eq.s32.totalorder %s21, 1
      %p123 = por %p121, %p122
      %p124 = scmp.ne.s32.totalorder %s115, %s116
      %p125 = scmp.eq.s32.totalorder %s21, 0
      %p126 = por %p124, %p125
      %p127 = scmp.ne.s32.totalorder %s115, %s116
      %p128 = scmp.eq.s32.totalorder %s22, 1
      %p129 = por %p127, %p128
      %p131 = scmp.ne.s32.totalorder %s116, %s130
      %p132 = scmp.eq.s32.totalorder %s22, 0
      %p133 = por %p131, %p132
      %s135 = sadd.s32 %s134, 1
      %p138 = scmp.eq.s32.totalorder %s16, 1
      %p139 = scmp.ne.s32.totalorder %s134, %s136
      %p140 = scmp.eq.s32.totalorder %s16, 0
      %p141 = por %p139, %p140
      %p142 = scmp.ne.s32.totalorder %s134, %s136
      %p143 = scmp.eq.s32.totalorder %s21, 1
      %p144 = por %p142, %p143
      %p145 = scmp.ne.s32.totalorder %s136, %s137
      %p146 = scmp.eq.s32.totalorder %s21, 0
      %p147 = por %p145, %p146
      %p148 = scmp.ne.s32.totalorder %s136, %s137
      %p149 = scmp.eq.s32.totalorder %s22, 1
      %p150 = por %p148, %p149
      %p152 = scmp.ne.s32.totalorder %s137, %s151
      %p153 = scmp.eq.s32.totalorder %s22, 0
      %p154 = por %p152, %p153
      %s156 = sadd.s32 %s155, 1
      %p159 = scmp.eq.s32.totalorder %s16, 1
      %p160 = scmp.ne.s32.totalorder %s155, %s157
      %p161 = scmp.eq.s32.totalorder %s16, 0
      %p162 = por %p160, %p161
      %p163 = scmp.ne.s32.totalorder %s155, %s157
      %p164 = scmp.eq.s32.totalorder %s21, 1
      %p165 = por %p163, %p164
      %p166 = scmp.ne.s32.totalorder %s157, %s158
      %p167 = scmp.eq.s32.totalorder %s21, 0
      %p168 = por %p166, %p167
      %p169 = scmp.ne.s32.totalorder %s157, %s158
      %p170 = scmp.eq.s32.totalorder %s22, 1
      %p171 = por %p169, %p170
      %p173 = scmp.ne.s32.totalorder %s158, %s172
      %p174 = scmp.eq.s32.totalorder %s22, 0
      %p175 = por %p173, %p174
      %s176 = ssub.s32 %s16, %s23
      %p177 = scmp.eq.s32.totalorder %s176, 0
      %s179 = sadd.s32 %s178, 1
      %s180 = scalar_select %p177, %s178, %s179
      %p183 = pneg %p177
      %p184 = scmp.eq.s32.totalorder %s16, 1
      %p185 = por %p183, %p184
      %p186 = scmp.ne.s32.totalorder %s178, %s181
      %p187 = scmp.eq.s32.totalorder %s16, 0
      %p188 = por %p186, %p187
      %p189 = scmp.ne.s32.totalorder %s178, %s181
      %p190 = scmp.eq.s32.totalorder %s21, 1
      %p191 = por %p189, %p190
      %p192 = scmp.ne.s32.totalorder %s181, %s182
      %p193 = scmp.eq.s32.totalorder %s21, 0
      %p194 = por %p192, %p193
      %p195 = scmp.ne.s32.totalorder %s181, %s182
      %p196 = scmp.eq.s32.totalorder %s22, 1
      %p197 = por %p195, %p196
      %p199 = scmp.ne.s32.totalorder %s182, %s198
      %p200 = scmp.eq.s32.totalorder %s22, 0
      %p201 = por %p199, %p200
      %p202 = scmp.le.s32.totalorder 1, %s16
      %p203 = scmp.lt.s32.totalorder %s16, 3
      %p204 = pnand %p202, %p203
      %p205 = pneg %p204
      // Predicated region
      $region9: #{reg_nagato_forward.1} parent=5 // pred_check
        _
      $region10: #{reg_nagato_forward.1} parent=5 // pred_check_branch
        %207 = sbr.rel (%p204) target = $region12
      $region11: #{reg_nagato_forward.1} parent=5 // pred_region
        %s208 = ssub.s32 %s16, 1
        // Predicated region
        $region13: #{reg_nagato_forward.1} parent=11 // pred_check
          %p209 = pneg %p63
        $region14: #{reg_nagato_forward.1} parent=11 // pred_check_branch
          %211 = sbr.rel (%p209) target = $region16
        $region15: #{reg_nagato_forward.1} parent=11 // pred_region
          _
        $region16: #{reg_nagato_forward.1} parent=11 // pred_fallthru
          _
        // Predicated region
        $region17: #{reg_nagato_forward.1} parent=11 // pred_check
          %p212 = pneg %p84
        $region18: #{reg_nagato_forward.1} parent=11 // pred_check_branch
          %214 = sbr.rel (%p212) target = $region20
        $region19: #{reg_nagato_forward.1} parent=11 // pred_region
          _
        $region20: #{reg_nagato_forward.1} parent=11 // pred_fallthru
          _
        // Predicated region
        $region21: #{reg_nagato_forward.1} parent=11 // pred_check
          %p215 = pneg %p105
        $region22: #{reg_nagato_forward.1} parent=11 // pred_check_branch
          %217 = sbr.rel (%p215) target = $region24
        $region23: #{reg_nagato_forward.1} parent=11 // pred_region
          _
        $region24: #{reg_nagato_forward.1} parent=11 // pred_fallthru
          _
        // Predicated region
        $region25: #{reg_nagato_forward.1} parent=11 // pred_check
          %p218 = pneg %p126
        $region26: #{reg_nagato_forward.1} parent=11 // pred_check_branch
          %220 = sbr.rel (%p218) target = $region28
        $region27: #{reg_nagato_forward.1} parent=11 // pred_region
          _
        $region28: #{reg_nagato_forward.1} parent=11 // pred_fallthru
          _
        // Predicated region
        $region29: #{reg_nagato_forward.1} parent=11 // pred_check
          %p221 = pneg %p147
        $region30: #{reg_nagato_forward.1} parent=11 // pred_check_branch
          %223 = sbr.rel (%p221) target = $region32
        $region31: #{reg_nagato_forward.1} parent=11 // pred_region
          _
        $region32: #{reg_nagato_forward.1} parent=11 // pred_fallthru
          _
        // Predicated region
        $region33: #{reg_nagato_forward.1} parent=11 // pred_check
          %p224 = pneg %p168
        $region34: #{reg_nagato_forward.1} parent=11 // pred_check_branch
          %226 = sbr.rel (%p224) target = $region36
        $region35: #{reg_nagato_forward.1} parent=11 // pred_region
          _
        $region36: #{reg_nagato_forward.1} parent=11 // pred_fallthru
          _
      $region12: #{reg_nagato_forward.1} parent=5 // pred_fallthru
        _
      %p227 = scmp.lt.s32.totalorder %s16, 2
      // Predicated region
      $region37: #{reg_nagato_forward.1} parent=5 // pred_check
        %p228 = pneg %p227
      $region38: #{reg_nagato_forward.1} parent=5 // pred_check_branch
        %230 = sbr.rel (%p228) target = $region40
      $region39: #{reg_nagato_forward.1} parent=5 // pred_region
        // Predicated region
        $region41: #{reg_nagato_forward.1} parent=39 // pred_check
          %p231 = pneg %p36
        $region42: #{reg_nagato_forward.1} parent=39 // pred_check_branch
          %233 = sbr.rel (%p231) target = $region44
        $region43: #{reg_nagato_forward.1} parent=39 // pred_region
          %p234 = scmp.lt.s32.totalorder %s16, 1
          %s235 = scalar_select %p234, %s16, 1
          %s236 = smul.addr %s235, 4
          %s237 = scalar_lea.vmem %s0, %s236
        $region44: #{reg_nagato_forward.1} parent=39 // pred_fallthru
          _
      $region40: #{reg_nagato_forward.1} parent=5 // pred_fallthru
        _
      %p238 = scmp.le.s32.totalorder 1, %s16
      %p239 = scmp.lt.s32.totalorder %s16, 3
      %p240 = pnand %p238, %p239
      %p241 = pneg %p240
      // Predicated region
      $region45: #{reg_nagato_forward.1} parent=5 // pred_check
        _
      $region46: #{reg_nagato_forward.1} parent=5 // pred_check_branch
        %243 = sbr.rel (%p240) target = $region48
      $region47: #{reg_nagato_forward.1} parent=5 // pred_region
        %s244 = ssub.s32 %s16, 1
        %p245 = scmp.lt.s32.totalorder %s21, 1
        %s246 = scalar_select %p245, %s21, 1
        %s247 = smul.addr %s246, 4
        %s248 = scalar_lea.vmem %s0, %s247
        %p249 = pneg %p42
        %p250 = pneg %p39
        %p251 = pneg %p63
        %p252 = pneg %p60
        %p253 = pneg %p84
        %p254 = pneg %p81
        %p255 = pneg %p105
        %p256 = pneg %p102
        %p257 = pneg %p126
        %p258 = pneg %p123
        %p259 = pneg %p147
        %p260 = pneg %p144
        %p261 = pneg %p168
        %p262 = pneg %p165
        %p263 = pneg %p194
        %p264 = pneg %p191
        %s265 = sand.u32 %s181, 1
        %s266 = scalar_lea.sflag [#allocation3], %s265
        %s267 = sand.u32 %s181, 1
        %s268 = smul.addr %s267, 8
        %s269 = scalar_lea.vmem [#allocation2], %s268
        %p270 = scmp.lt.s32.totalorder %s21, 1
        %s271 = scalar_select %p270, %s21, 1
        %s272 = smul.addr %s271, 4
        %s273 = scalar_lea.vmem %s0, %s272
        %v275 = vld [vmem:[%s273] sm:$0xf]
        %v276 = vld [vmem:[%s1] sm:$0xff]
        %v277 = vld [vmem:[%s1 + $0x8] sm:$0xff]
        %v278 = vld [vmem:[%s1 + $0x10] sm:$0xff]
        %v279 = vld [vmem:[%s1 + $0x18] sm:$0xff]
        %v280 = vld [vmem:[%s1 + $0x20] sm:$0xff]
        %v281 = vld [vmem:[%s1 + $0x28] sm:$0xff]
        %v282 = vld [vmem:[%s1 + $0x30] sm:$0xff]
        %v283 = vld [vmem:[%s1 + $0x38] sm:$0xff]
        %v284 = vld [vmem:[%s1 + $0x40] sm:$0xff]
        %v285 = vld [vmem:[%s1 + $0x48] sm:$0xff]
        %v286 = vld [vmem:[%s1 + $0x50] sm:$0xff]
        %v287 = vld [vmem:[%s1 + $0x58] sm:$0xff]
        %v288 = vld [vmem:[%s1 + $0x60] sm:$0xff]
        %v289 = vld [vmem:[%s1 + $0x68] sm:$0xff]
        %v290 = vld [vmem:[%s1 + $0x70] sm:$0xff]
        %v291 = vld [vmem:[%s1 + $0x78] sm:$0xff]
        %v292 = vld [vmem:[%s2] sm:$0x3]
        %v294 = vlaneseq
        %v295 = vshrl.u32 %v294, 7
        %v296 = vsub.s32 0, %v295
        %v297 = vrot.slane %v292, %v296
        %v298 = vlaneseq
        %v299 = vshrl.u32 %v298, 7
        %v300 = vsub.s32 1, %v299
        %v301 = vrot.slane %v292, %v300
        %v320 = vunpack.c.l.b16 %v276
        %v321 = vunpack.c.h.b16 %v276
        %v322 = vunpack.c.l.b16 %v277
        %v323 = vunpack.c.h.b16 %v277
        %v324 = vunpack.c.l.b16 %v278
        %v325 = vunpack.c.h.b16 %v278
        %v326 = vunpack.c.l.b16 %v279
        %v327 = vunpack.c.h.b16 %v279
        %v328 = vunpack.c.l.b16 %v280
        %v329 = vunpack.c.h.b16 %v280
        %v330 = vunpack.c.l.b16 %v281
        %v331 = vunpack.c.h.b16 %v281
        %v332 = vunpack.c.l.b16 %v282
        %v333 = vunpack.c.h.b16 %v282
        %v334 = vunpack.c.l.b16 %v283
        %v335 = vunpack.c.h.b16 %v283
        %v336 = vunpack.c.l.b16 %v284
        %v337 = vunpack.c.h.b16 %v284
        %v338 = vunpack.c.l.b16 %v285
        %v339 = vunpack.c.h.b16 %v285
        %v340 = vunpack.c.l.b16 %v286
        %v341 = vunpack.c.h.b16 %v286
        %v342 = vunpack.c.l.b16 %v287
        %v343 = vunpack.c.h.b16 %v287
        %v344 = vunpack.c.l.b16 %v288
        %v345 = vunpack.c.h.b16 %v288
        %v346 = vunpack.c.l.b16 %v289
        %v347 = vunpack.c.h.b16 %v289
        %v348 = vunpack.c.l.b16 %v290
        %v349 = vunpack.c.h.b16 %v290
        %v350 = vunpack.c.l.b16 %v291
        %v351 = vunpack.c.h.b16 %v291
        %v352 = vpack.c.b16 %v322, %v320
        %v353 = vpack.c.b16 %v323, %v321
        %v354 = vpack.c.b16 %v326, %v324
        %v355 = vpack.c.b16 %v327, %v325
        %v356 = vpack.c.b16 %v330, %v328
        %v357 = vpack.c.b16 %v331, %v329
        %v358 = vpack.c.b16 %v334, %v332
        %v359 = vpack.c.b16 %v335, %v333
        %v360 = vpack.c.b16 %v338, %v336
        %v361 = vpack.c.b16 %v339, %v337
        %v362 = vpack.c.b16 %v342, %v340
        %v363 = vpack.c.b16 %v343, %v341
        %v364 = vpack.c.b16 %v346, %v344
        %v365 = vpack.c.b16 %v347, %v345
        %v366 = vpack.c.b16 %v350, %v348
        %v367 = vpack.c.b16 %v351, %v349
        %384 = vmatprep.subr.bf16.mxu0 %v353
        %385 = vmatpush1.bf16.msra.mxu0 %v352
        %386 = vmatprep.subr.bf16.mxu0 %v355
        %387 = vmatpush1.bf16.msra.mxu0 %v354
        %388 = vmatprep.subr.bf16.mxu0 %v357
        %389 = vmatpush1.bf16.msra.mxu0 %v356
        %390 = vmatprep.subr.bf16.mxu0 %v359
        %391 = vmatpush1.bf16.msra.mxu0 %v358
        %392 = vmatprep.subr.bf16.mxu0 %v361
        %393 = vmatpush1.bf16.msra.mxu0 %v360
        %394 = vmatprep.subr.bf16.mxu0 %v363
        %395 = vmatpush1.bf16.msra.mxu0 %v362
        %396 = vmatprep.subr.bf16.mxu0 %v365
        %397 = vmatpush1.bf16.msra.mxu0 %v364
        %398 = vmatprep.subr.bf16.mxu0 %v367
        %399 = vmatpush1.bf16.msra.mxu0 %v366
        %400 = vmatprep.subr.bf16.mxu0 0
        %401 = vmatpush1.bf16.msra.mxu0 0
        %402 = vmatprep.subr.bf16.mxu0 0
        %403 = vmatpush1.bf16.msra.mxu0 0
        %404 = vmatprep.subr.bf16.mxu0 0
        %405 = vmatpush1.bf16.msra.mxu0 0
        %406 = vmatprep.subr.bf16.mxu0 0
        %407 = vmatpush1.bf16.msra.mxu0 0
        %408 = vmatprep.subr.bf16.mxu0 0
        %409 = vmatpush1.bf16.msra.mxu0 0
        %410 = vmatprep.subr.bf16.mxu0 0
        %411 = vmatpush1.bf16.msra.mxu0 0
        %412 = vmatprep.subr.bf16.mxu0 0
        %413 = vmatpush1.bf16.msra.mxu0 0
        %414 = vmatprep.subr.bf16.mxu0 0
        %415 = vmatpush1.bf16.msra.mxu0 0
        %416 = vmatprep.mubr.bf16.mxu0 0
        %417 = vmatmul.mubr.bf16.gmra.mrb[0].mxu0 %v275
        %v418 = vpop.f32.mrb[0].mxu0
        %v419 = vadd.f32 %v297, %v418
        %v420 = vpop.f32.mrb[0].mxu0
        %v421 = vadd.f32 %v301, %v420
        %v422 = vpop.f32.mrb[0].mxu0
        %v423 = vpop.f32.mrb[0].mxu0
        %424 = vdwg.mxu0
        %vm425 = vcmp.gt.f32.partialorder %v419, 0.0
        %vm426 = vcmp.gt.f32.partialorder %v421, 0.0
        %v427 = vmul.f32 %v419, 0.01
        %v428 = vmul.f32 %v421, 0.01
        %v429 = vsel %vm425, %v419, %v427
        %v430 = vsel %vm426, %v421, %v428
        %v431 = vpack.c.bf16 %v429, %v429
        %v432 = vpack.c.bf16 %v430, %v430
        %v433 = vld [vmem:[%s3] sm:$0xff]
        %v434 = vld [vmem:[%s3 + $0x8] sm:$0xff]
        %v435 = vld [vmem:[%s3 + $0x10] sm:$0xff]
        %v436 = vld [vmem:[%s3 + $0x18] sm:$0xff]
        %v437 = vld [vmem:[%s3 + $0x20] sm:$0xff]
        %v438 = vld [vmem:[%s3 + $0x28] sm:$0xff]
        %v439 = vld [vmem:[%s3 + $0x30] sm:$0xff]
        %v440 = vld [vmem:[%s3 + $0x38] sm:$0xff]
        %v441 = vld [vmem:[%s3 + $0x40] sm:$0xff]
        %v442 = vld [vmem:[%s3 + $0x48] sm:$0xff]
        %v443 = vld [vmem:[%s3 + $0x50] sm:$0xff]
        %v444 = vld [vmem:[%s3 + $0x58] sm:$0xff]
        %v445 = vld [vmem:[%s3 + $0x60] sm:$0xff]
        %v446 = vld [vmem:[%s3 + $0x68] sm:$0xff]
        %v447 = vld [vmem:[%s3 + $0x70] sm:$0xff]
        %v448 = vld [vmem:[%s3 + $0x78] sm:$0xff]
        %v449 = vld [vmem:[%s3 + $0x80] sm:$0xff]
        %v450 = vld [vmem:[%s3 + $0x88] sm:$0xff]
        %v451 = vld [vmem:[%s3 + $0x90] sm:$0xff]
        %v452 = vld [vmem:[%s3 + $0x98] sm:$0xff]
        %v453 = vld [vmem:[%s3 + $0xa0] sm:$0xff]
        %v454 = vld [vmem:[%s3 + $0xa8] sm:$0xff]
        %v455 = vld [vmem:[%s3 + $0xb0] sm:$0xff]
        %v456 = vld [vmem:[%s3 + $0xb8] sm:$0xff]
        %v457 = vld [vmem:[%s3 + $0xc0] sm:$0xff]
        %v458 = vld [vmem:[%s3 + $0xc8] sm:$0xff]
        %v459 = vld [vmem:[%s3 + $0xd0] sm:$0xff]
        %v460 = vld [vmem:[%s3 + $0xd8] sm:$0xff]
        %v461 = vld [vmem:[%s3 + $0xe0] sm:$0xff]
        %v462 = vld [vmem:[%s3 + $0xe8] sm:$0xff]
        %v463 = vld [vmem:[%s3 + $0xf0] sm:$0xff]
        %v464 = vld [vmem:[%s3 + $0xf8] sm:$0xff]
        %v465 = vld [vmem:[%s4] sm:$0x3]
        %v467 = vlaneseq
        %v468 = vshrl.u32 %v467, 7
        %v469 = vsub.s32 0, %v468
        %v470 = vrot.slane %v465, %v469
        %v471 = vlaneseq
        %v472 = vshrl.u32 %v471, 7
        %v473 = vsub.s32 1, %v472
        %v474 = vrot.slane %v465, %v473
        %v509 = vunpack.c.l.b16 %v433
        %v510 = vunpack.c.h.b16 %v433
        %v511 = vunpack.c.l.b16 %v434
        %v512 = vunpack.c.h.b16 %v434
        %v513 = vunpack.c.l.b16 %v435
        %v514 = vunpack.c.h.b16 %v435
        %v515 = vunpack.c.l.b16 %v436
        %v516 = vunpack.c.h.b16 %v436
        %v517 = vunpack.c.l.b16 %v437
        %v518 = vunpack.c.h.b16 %v437
        %v519 = vunpack.c.l.b16 %v438
        %v520 = vunpack.c.h.b16 %v438
        %v521 = vunpack.c.l.b16 %v439
        %v522 = vunpack.c.h.b16 %v439
        %v523 = vunpack.c.l.b16 %v440
        %v524 = vunpack.c.h.b16 %v440
        %v525 = vunpack.c.l.b16 %v441
        %v526 = vunpack.c.h.b16 %v441
        %v527 = vunpack.c.l.b16 %v442
        %v528 = vunpack.c.h.b16 %v442
        %v529 = vunpack.c.l.b16 %v443
        %v530 = vunpack.c.h.b16 %v443
        %v531 = vunpack.c.l.b16 %v444
        %v532 = vunpack.c.h.b16 %v444
        %v533 = vunpack.c.l.b16 %v445
        %v534 = vunpack.c.h.b16 %v445
        %v535 = vunpack.c.l.b16 %v446
        %v536 = vunpack.c.h.b16 %v446
        %v537 = vunpack.c.l.b16 %v447
        %v538 = vunpack.c.h.b16 %v447
        %v539 = vunpack.c.l.b16 %v448
        %v540 = vunpack.c.h.b16 %v448
        %v541 = vunpack.c.l.b16 %v449
        %v542 = vunpack.c.h.b16 %v449
        %v543 = vunpack.c.l.b16 %v450
        %v544 = vunpack.c.h.b16 %v450
        %v545 = vunpack.c.l.b16 %v451
        %v546 = vunpack.c.h.b16 %v451
        %v547 = vunpack.c.l.b16 %v452
        %v548 = vunpack.c.h.b16 %v452
        %v549 = vunpack.c.l.b16 %v453
        %v550 = vunpack.c.h.b16 %v453
        %v551 = vunpack.c.l.b16 %v454
        %v552 = vunpack.c.h.b16 %v454
        %v553 = vunpack.c.l.b16 %v455
        %v554 = vunpack.c.h.b16 %v455
        %v555 = vunpack.c.l.b16 %v456
        %v556 = vunpack.c.h.b16 %v456
        %v557 = vunpack.c.l.b16 %v457
        %v558 = vunpack.c.h.b16 %v457
        %v559 = vunpack.c.l.b16 %v458
        %v560 = vunpack.c.h.b16 %v458
        %v561 = vunpack.c.l.b16 %v459
        %v562 = vunpack.c.h.b16 %v459
        %v563 = vunpack.c.l.b16 %v460
        %v564 = vunpack.c.h.b16 %v460
        %v565 = vunpack.c.l.b16 %v461
        %v566 = vunpack.c.h.b16 %v461
        %v567 = vunpack.c.l.b16 %v462
        %v568 = vunpack.c.h.b16 %v462
        %v569 = vunpack.c.l.b16 %v463
        %v570 = vunpack.c.h.b16 %v463
        %v571 = vunpack.c.l.b16 %v464
        %v572 = vunpack.c.h.b16 %v464
        %v573 = vpack.c.b16 %v511, %v509
        %v574 = vpack.c.b16 %v512, %v510
        %v575 = vpack.c.b16 %v515, %v513
        %v576 = vpack.c.b16 %v516, %v514
        %v577 = vpack.c.b16 %v519, %v517
        %v578 = vpack.c.b16 %v520, %v518
        %v579 = vpack.c.b16 %v523, %v521
        %v580 = vpack.c.b16 %v524, %v522
        %v581 = vpack.c.b16 %v527, %v525
        %v582 = vpack.c.b16 %v528, %v526
        %v583 = vpack.c.b16 %v531, %v529
        %v584 = vpack.c.b16 %v532, %v530
        %v585 = vpack.c.b16 %v535, %v533
        %v586 = vpack.c.b16 %v536, %v534
        %v587 = vpack.c.b16 %v539, %v537
        %v588 = vpack.c.b16 %v540, %v538
        %v589 = vpack.c.b16 %v543, %v541
        %v590 = vpack.c.b16 %v544, %v542
        %v591 = vpack.c.b16 %v547, %v545
        %v592 = vpack.c.b16 %v548, %v546
        %v593 = vpack.c.b16 %v551, %v549
        %v594 = vpack.c.b16 %v552, %v550
        %v595 = vpack.c.b16 %v555, %v553
        %v596 = vpack.c.b16 %v556, %v554
        %v597 = vpack.c.b16 %v559, %v557
        %v598 = vpack.c.b16 %v560, %v558
        %v599 = vpack.c.b16 %v563, %v561
        %v600 = vpack.c.b16 %v564, %v562
        %v601 = vpack.c.b16 %v567, %v565
        %v602 = vpack.c.b16 %v568, %v566
        %v603 = vpack.c.b16 %v571, %v569
        %v604 = vpack.c.b16 %v572, %v570
        %637 = vmatprep.subr.bf16.mxu0 %v574
        %638 = vmatpush1.bf16.msra.mxu0 %v573
        %639 = vmatprep.subr.bf16.mxu0 %v576
        %640 = vmatpush1.bf16.msra.mxu0 %v575
        %641 = vmatprep.subr.bf16.mxu0 %v578
        %642 = vmatpush1.bf16.msra.mxu0 %v577
        %643 = vmatprep.subr.bf16.mxu0 %v580
        %644 = vmatpush1.bf16.msra.mxu0 %v579
        %645 = vmatprep.subr.bf16.mxu0 %v582
        %646 = vmatpush1.bf16.msra.mxu0 %v581
        %647 = vmatprep.subr.bf16.mxu0 %v584
        %648 = vmatpush1.bf16.msra.mxu0 %v583
        %649 = vmatprep.subr.bf16.mxu0 %v586
        %650 = vmatpush1.bf16.msra.mxu0 %v585
        %651 = vmatprep.subr.bf16.mxu0 %v588
        %652 = vmatpush1.bf16.msra.mxu0 %v587
        %653 = vmatprep.subr.bf16.mxu0 %v590
        %654 = vmatpush1.bf16.msra.mxu0 %v589
        %655 = vmatprep.subr.bf16.mxu0 %v592
        %656 = vmatpush1.bf16.msra.mxu0 %v591
        %657 = vmatprep.subr.bf16.mxu0 %v594
        %658 = vmatpush1.bf16.msra.mxu0 %v593
        %659 = vmatprep.subr.bf16.mxu0 %v596
        %660 = vmatpush1.bf16.msra.mxu0 %v595
        %661 = vmatprep.subr.bf16.mxu0 %v598
        %662 = vmatpush1.bf16.msra.mxu0 %v597
        %663 = vmatprep.subr.bf16.mxu0 %v600
        %664 = vmatpush1.bf16.msra.mxu0 %v599
        %665 = vmatprep.subr.bf16.mxu0 %v602
        %666 = vmatpush1.bf16.msra.mxu0 %v601
        %667 = vmatprep.subr.bf16.mxu0 %v604
        %668 = vmatpush1.bf16.msra.mxu0 %v603
        %669 = vmatprep.mubr.bf16.mxu0 %v432
        %670 = vmatmul.mubr.bf16.gmra.mrb[0].mxu0 %v431
        %v671 = vpop.f32.mrb[0].mxu0
        %v672 = vadd.f32 %v470, %v671
        %v673 = vpop.f32.mrb[0].mxu0
        %v674 = vadd.f32 %v474, %v673
        %v675 = vpop.f32.mrb[0].mxu0
        %v676 = vpop.f32.mrb[0].mxu0
        %677 = vdwg.mxu0
        %vm678 = vcmp.gt.f32.partialorder %v672, 0.0
        %vm679 = vcmp.gt.f32.partialorder %v674, 0.0
        %v680 = vmul.f32 %v672, 0.01
        %v681 = vmul.f32 %v674, 0.01
        %v682 = vsel %vm678, %v672, %v680
        %v683 = vsel %vm679, %v674, %v681
        %v684 = vpack.c.bf16 %v682, %v682
        %v685 = vpack.c.bf16 %v683, %v683
        %v686 = vld [vmem:[%s5] sm:$0xf]
        %v687 = vld [vmem:[%s5 + $0x4] sm:$0xf]
        %v688 = vld [vmem:[%s5 + $0x8] sm:$0xf]
        %v689 = vld [vmem:[%s5 + $0xc] sm:$0xf]
        %v690 = vld [vmem:[%s5 + $0x10] sm:$0xf]
        %v691 = vld [vmem:[%s5 + $0x14] sm:$0xf]
        %v692 = vld [vmem:[%s5 + $0x18] sm:$0xf]
        %v693 = vld [vmem:[%s5 + $0x1c] sm:$0xf]
        %v694 = vld [vmem:[%s5 + $0x20] sm:$0xf]
        %v695 = vld [vmem:[%s5 + $0x24] sm:$0xf]
        %v696 = vld [vmem:[%s5 + $0x28] sm:$0xf]
        %v697 = vld [vmem:[%s5 + $0x2c] sm:$0xf]
        %v698 = vld [vmem:[%s5 + $0x30] sm:$0xf]
        %v699 = vld [vmem:[%s5 + $0x34] sm:$0xf]
        %v700 = vld [vmem:[%s5 + $0x38] sm:$0xf]
        %v701 = vld [vmem:[%s5 + $0x3c] sm:$0xf]
        %v702 = vld [vmem:[%s5 + $0x40] sm:$0xf]
        %v703 = vld [vmem:[%s5 + $0x44] sm:$0xf]
        %v704 = vld [vmem:[%s5 + $0x48] sm:$0xf]
        %v705 = vld [vmem:[%s5 + $0x4c] sm:$0xf]
        %v706 = vld [vmem:[%s5 + $0x50] sm:$0xf]
        %v707 = vld [vmem:[%s5 + $0x54] sm:$0xf]
        %v708 = vld [vmem:[%s5 + $0x58] sm:$0xf]
        %v709 = vld [vmem:[%s5 + $0x5c] sm:$0xf]
        %v710 = vld [vmem:[%s5 + $0x60] sm:$0xf]
        %v711 = vld [vmem:[%s5 + $0x64] sm:$0xf]
        %v712 = vld [vmem:[%s5 + $0x68] sm:$0xf]
        %v713 = vld [vmem:[%s5 + $0x6c] sm:$0xf]
        %v714 = vld [vmem:[%s5 + $0x70] sm:$0xf]
        %v715 = vld [vmem:[%s5 + $0x74] sm:$0xf]
        %v716 = vld [vmem:[%s5 + $0x78] sm:$0xf]
        %v717 = vld [vmem:[%s5 + $0x7c] sm:$0xf]
        %v718 = vld [vmem:[%s6] sm:$0x1]
        %v720 = vlaneseq
        %v721 = vshrl.u32 %v720, 7
        %v722 = vsub.s32 0, %v721
        %v723 = vrot.slane %v718, %v722
        %v757 = vunpack.c.l.b16 %v686
        %v758 = vunpack.c.l.b16 %v687
        %v759 = vunpack.c.l.b16 %v688
        %v760 = vunpack.c.l.b16 %v689
        %v761 = vunpack.c.l.b16 %v690
        %v762 = vunpack.c.l.b16 %v691
        %v763 = vunpack.c.l.b16 %v692
        %v764 = vunpack.c.l.b16 %v693
        %v765 = vunpack.c.l.b16 %v694
        %v766 = vunpack.c.l.b16 %v695
        %v767 = vunpack.c.l.b16 %v696
        %v768 = vunpack.c.l.b16 %v697
        %v769 = vunpack.c.l.b16 %v698
        %v770 = vunpack.c.l.b16 %v699
        %v771 = vunpack.c.l.b16 %v700
        %v772 = vunpack.c.l.b16 %v701
        %v773 = vunpack.c.l.b16 %v702
        %v774 = vunpack.c.l.b16 %v703
        %v775 = vunpack.c.l.b16 %v704
        %v776 = vunpack.c.l.b16 %v705
        %v777 = vunpack.c.l.b16 %v706
        %v778 = vunpack.c.l.b16 %v707
        %v779 = vunpack.c.l.b16 %v708
        %v780 = vunpack.c.l.b16 %v709
        %v781 = vunpack.c.l.b16 %v710
        %v782 = vunpack.c.l.b16 %v711
        %v783 = vunpack.c.l.b16 %v712
        %v784 = vunpack.c.l.b16 %v713
        %v785 = vunpack.c.l.b16 %v714
        %v786 = vunpack.c.l.b16 %v715
        %v787 = vunpack.c.l.b16 %v716
        %v788 = vunpack.c.l.b16 %v717
        %v789 = vpack.c.b16 %v758, %v757
        %v790 = vpack.c.b16 %v760, %v759
        %v791 = vpack.c.b16 %v762, %v761
        %v792 = vpack.c.b16 %v764, %v763
        %v793 = vpack.c.b16 %v766, %v765
        %v794 = vpack.c.b16 %v768, %v767
        %v795 = vpack.c.b16 %v770, %v769
        %v796 = vpack.c.b16 %v772, %v771
        %v797 = vpack.c.b16 %v774, %v773
        %v798 = vpack.c.b16 %v776, %v775
        %v799 = vpack.c.b16 %v778, %v777
        %v800 = vpack.c.b16 %v780, %v779
        %v801 = vpack.c.b16 %v782, %v781
        %v802 = vpack.c.b16 %v784, %v783
        %v803 = vpack.c.b16 %v786, %v785
        %v804 = vpack.c.b16 %v788, %v787
        %821 = vmatprep.subr.bf16.mxu0 0
        %822 = vmatpush1.bf16.msra.mxu0 %v789
        %823 = vmatprep.subr.bf16.mxu0 0
        %824 = vmatpush1.bf16.msra.mxu0 %v790
        %825 = vmatprep.subr.bf16.mxu0 0
        %826 = vmatpush1.bf16.msra.mxu0 %v791
        %827 = vmatprep.subr.bf16.mxu0 0
        %828 = vmatpush1.bf16.msra.mxu0 %v792
        %829 = vmatprep.subr.bf16.mxu0 0
        %830 = vmatpush1.bf16.msra.mxu0 %v793
        %831 = vmatprep.subr.bf16.mxu0 0
        %832 = vmatpush1.bf16.msra.mxu0 %v794
        %833 = vmatprep.subr.bf16.mxu0 0
        %834 = vmatpush1.bf16.msra.mxu0 %v795
        %835 = vmatprep.subr.bf16.mxu0 0
        %836 = vmatpush1.bf16.msra.mxu0 %v796
        %837 = vmatprep.subr.bf16.mxu0 0
        %838 = vmatpush1.bf16.msra.mxu0 %v797
        %839 = vmatprep.subr.bf16.mxu0 0
        %840 = vmatpush1.bf16.msra.mxu0 %v798
        %841 = vmatprep.subr.bf16.mxu0 0
        %842 = vmatpush1.bf16.msra.mxu0 %v799
        %843 = vmatprep.subr.bf16.mxu0 0
        %844 = vmatpush1.bf16.msra.mxu0 %v800
        %845 = vmatprep.subr.bf16.mxu0 0
        %846 = vmatpush1.bf16.msra.mxu0 %v801
        %847 = vmatprep.subr.bf16.mxu0 0
        %848 = vmatpush1.bf16.msra.mxu0 %v802
        %849 = vmatprep.subr.bf16.mxu0 0
        %850 = vmatpush1.bf16.msra.mxu0 %v803
        %851 = vmatprep.subr.bf16.mxu0 0
        %852 = vmatpush1.bf16.msra.mxu0 %v804
        %853 = vmatprep.mubr.bf16.mxu0 %v685
        %854 = vmatmul.mubr.bf16.gmra.mrb[0].mxu0 %v684
        %v855 = vpop.f32.mrb[0].mxu0
        %v856 = vadd.f32 %v723, %v855
        %v857 = vpop.f32.mrb[0].mxu0
        %v858 = vpop.f32.mrb[0].mxu0
        %v859 = vpop.f32.mrb[0].mxu0
        %860 = vdwg.mxu0
        %861 = vst [vmem:[%s269] sm:$0xff] %v856
        %s862 = sand.u32 %s181, 1
        %s863 = scalar_lea.sflag [#allocation3], %s862
        %s864 = sand.u32 %s181, 1
        %s865 = smul.addr %s864, 8
        %s866 = scalar_lea.vmem [#allocation2], %s865
        // Predicated region
        $region49: #{reg_nagato_forward.1} parent=47 // pred_check
          %p867 = pneg %p191
        $region50: #{reg_nagato_forward.1} parent=47 // pred_check_branch
          %869 = sbr.rel (%p867) target = $region52
        $region51: #{reg_nagato_forward.1} parent=47 // pred_region
          %s871 = ssub.s32 128, 128
          %872 = vsyncadd %s863, %s871
          %s873 = smul.addr %s21, 128
          %s874 = scalar_lea.hbm %s7, %s873
          %s876 = sshll.u32 %s866, 4
          %s877 = int_to_ptr.vmem [resolvable:$true] %s876
          %879 = dma.vmem_to_hbm [thread:$0]  %s877, 128, %s874, %s863
        $region52: #{reg_nagato_forward.1} parent=47 // pred_fallthru
          _
      $region48: #{reg_nagato_forward.1} parent=5 // pred_fallthru
        _
      %p880 = scmp.le.s32.totalorder 2, %s16
      // Predicated region
      $region53: #{reg_nagato_forward.1} parent=5 // pred_check
        %p881 = pneg %p880
      $region54: #{reg_nagato_forward.1} parent=5 // pred_check_branch
        %883 = sbr.rel (%p881) target = $region56
      $region55: #{reg_nagato_forward.1} parent=5 // pred_region
        %s884 = ssub.s32 %s16, 2
        // Predicated region
        $region57: #{reg_nagato_forward.1} parent=55 // pred_check
          %p885 = pneg %p197
        $region58: #{reg_nagato_forward.1} parent=55 // pred_check_branch
          %887 = sbr.rel (%p885) target = $region60
        $region59: #{reg_nagato_forward.1} parent=55 // pred_region
          %s888 = sand.u32 %s182, 1
          %s889 = scalar_lea.sflag [#allocation3], %s888
          %s890 = sand.u32 %s182, 1
          %s891 = smul.addr %s890, 8
          %s892 = scalar_lea.vmem [#allocation2], %s891
          %893 = dma.done %s889, 128
        $region60: #{reg_nagato_forward.1} parent=55 // pred_fallthru
          _
      $region56: #{reg_nagato_forward.1} parent=5 // pred_fallthru
        _
    $region6: #{reg_nagato_forward.1} parent=1 // loop_footer
      %s20 = sadd.s32 1, %s16
    $region7: #{reg_nagato_forward.1} parent=1 // loop_footer_branch
      %15 = sbr.rel target = $region3
    $region8: #{reg_nagato_forward.1} parent=1 // loop_exit
      _
    %894 = vsyncpa [#allocation3], 1
    %s895 = scalar_lea.sflag [#allocation3], 1
    %896 = vsyncpa %s895, 1

</llo_original>
